<compile_context>
chip_gen: v7x
topology: tpu7x:2x2x1
jax: 0.10.0
libtpu: 0.0.40
codegen_flags: <defaults>
</compile_context>

<pallas_src>
import math
import functools

import jax
import jax.numpy as jnp
from jax.experimental import pallas as pl
from jax.experimental.pallas import tpu as pltpu


def _round_up(x: int, m: int) -> int:
    return ((x + m - 1) // m) * m


def _vmem_capacity_bytes() -> int:
    """Per-core VMEM capacity; conservative (v7x, 64 MiB) fallback if the query fails."""
    try:
        return int(pltpu.get_tpu_info().vmem_capacity_bytes)
    except Exception:
        return 64 * 1024 * 1024


def _token_embedding_kernel(ids_ref, table_ref, out_ref, acc_ref, *,
                            scale, v_tile, precision):
    # ids_ref:   (T, 1)  int32 token ids for this token block (constant across vocab axis)
    # table_ref: (Vt, E) vocab chunk of the embedding table
    # out_ref:   (T, E)  output block (same block across the vocab axis -> written once)
    # acc_ref:   (T, E)  f32 accumulator scratch
    k = pl.program_id(1)

    @pl.when(k == 0)
    def _init():
        acc_ref[...] = jnp.zeros_like(acc_ref)

    ids = ids_ref[...]                                              # (T, 1) int32
    # (1, Vt) iota + broadcasting compare: no (T, V) int32 materialization.
    chunk_iota = jax.lax.broadcasted_iota(jnp.int32, (1, v_tile), 1) + k * v_tile
    onehot = (ids == chunk_iota).astype(table_ref.dtype)            # (T, Vt), exact 0/1
    acc_ref[...] += jnp.dot(onehot, table_ref[...],
                            preferred_element_type=jnp.float32,
                            precision=precision)

    @pl.when(k == pl.num_programs(1) - 1)
    def _finalize():
        out_ref[...] = (acc_ref[...] * scale).astype(out_ref.dtype)


def token_embedding(tokens, table, *, block_tokens: int = 512):
    """Pallas equivalent of TokenEmbedding.forward: embedding(tokens) * sqrt(emb_size)."""
    B, S = tokens.shape
    V, E = table.shape
    N = B * S
    scale = float(math.sqrt(E))

    # --- Token block: multiple of 8 (sublane-dense), default 512; shrink for tiny N so
    # padded rows stay < 8.  Output last dim is E (full-dim block -> always legal).
    T = min(block_tokens, _round_up(N, 8))
    T = max(8, _round_up(T, 8))
    N_pad = _round_up(N, T)

    ids = jnp.clip(tokens.reshape(N).astype(jnp.int32), 0, V - 1)   # guard OOB ids
    ids = jnp.pad(ids, (0, N_pad - N)).reshape(N_pad, 1)

    tab_bytes = jnp.dtype(table.dtype).itemsize
    out_bytes = tab_bytes

    # --- Generation-aware VMEM budget (v5e/v6e: 128 MiB -> ~96 usable; v7x: 64 -> ~48).
    vmem_cap = _vmem_capacity_bytes()
    vmem_limit = min(int(0.75 * vmem_cap), 100 * 1024 * 1024)

    # Per-step VMEM that does not depend on the vocab chunk: double-buffered (T, E)
    # output, f32 accumulator, ids, slack for compiler internals.
    fixed = 2 * T * E * out_bytes + T * E * 4 + 2 * T * 4 + 256 * 1024
    table_budget = max(vmem_limit - fixed, 1 * 1024 * 1024)

    # Fully-resident table (single vocab chunk; constant block index -> DMA'd once and
    # reused across all token blocks).  Constant-index blocks still get 2 buffers, and
    # the (T, V) one-hot intermediate must also fit.
    resident_cost = 2 * V * E * tab_bytes + T * _round_up(V, 128) * tab_bytes
    if resident_cost <= table_budget:
        v_tile = V
        table_in = table
    else:
        # Stream the table in vocab chunks; intermediates stay (T, Vt)-sized.
        per_row = (2 * E + T) * tab_bytes
        v_tile = int(table_budget // per_row)
        v_tile = max(128, min(2048, (v_tile // 8) * 8))
        v_pad = _round_up(V, v_tile)
        table_in = jnp.pad(table, ((0, v_pad - V), (0, 0)))  # padded rows never match an id

    V_pad = table_in.shape[0]
    n_tok = N_pad // T
    n_v = V_pad // v_tile

    # Exact lookup for f32 tables (avoid single-pass bf16 truncation); bf16 tables are
    # already exact with a single MXU pass.
    precision = (jax.lax.Precision.HIGHEST if table.dtype == jnp.float32
                 else jax.lax.Precision.DEFAULT)

    kernel = functools.partial(_token_embedding_kernel, scale=scale,
                               v_tile=v_tile, precision=precision)

    table_read_bytes = (V * E * tab_bytes if n_v == 1          # one bulk resident load
                        else n_tok * V_pad * E * tab_bytes)    # re-streamed per token block
    cost = pl.CostEstimate(
        flops=2 * N_pad * V_pad * E,
        transcendentals=0,
        bytes_accessed=N_pad * E * out_bytes + table_read_bytes + N_pad * 4,
    )

    out_flat = pl.pallas_call(
        kernel,
        out_shape=jax.ShapeDtypeStruct((N_pad, E), table.dtype),
        grid_spec=pltpu.PrefetchScalarGridSpec(
            num_scalar_prefetch=0,
            grid=(n_tok, n_v),
            in_specs=[
                # (T, 1) ids block per token block; constant across the vocab axis.
                pl.BlockSpec((T, 1), lambda i, k: (i, 0)),
                # (Vt, E) vocab chunk (Vt == V -> resident, constant block index).
                pl.BlockSpec((v_tile, E), lambda i, k: (k, 0)),
            ],
            out_specs=pl.BlockSpec((T, E), lambda i, k: (i, 0)),
            scratch_shapes=[pltpu.VMEM((T, E), jnp.float32)],
        ),
        compiler_params=pltpu.CompilerParams(
            dimension_semantics=("parallel", "arbitrary"),
            vmem_limit_bytes=vmem_limit,
        ),
        cost_estimate=cost,
    )(ids, table_in)

    return out_flat[:N].reshape(B, S, E)


if __name__ == "__main__":
    vocab_size = 32
    emb_size = 128
    batch, seq = 2, 8

    key = jax.random.PRNGKey(0)
    k_tab, k_tok = jax.random.split(key)

    # Deterministic parameter init (nn.Embedding default: N(0, 1))
    table = jax.random.normal(k_tab, (vocab_size, emb_size), dtype=jnp.float32)
    tokens = jax.random.randint(k_tok, (batch, seq), 0, vocab_size, dtype=jnp.int32)

    out = token_embedding(tokens, table)
    out = jax.block_until_ready(out)

    # Reference check in plain JAX.
    ref = table[tokens] * math.sqrt(emb_size)
    assert out.shape == (batch, seq, emb_size)
    # With Precision.HIGHEST the one-hot gather is essentially exact; tolerance kept
    # loose as a guard against lower-precision MXU decompositions.
    assert jnp.allclose(out, ref, atol=1e-2, rtol=1e-2), "mismatch vs reference embedding lookup"

    print("KERNEL_OK")
</pallas_src>

<mosaic_0001>
module attributes {stable_mosaic.version = 11 : i64} {
  func.func @_token_embedding_kernel(%arg0: i32, %arg1: i32, %arg2: memref<16x1xi32, #tpu.memory_space<vmem>>, %arg3: memref<32x128xf32, #tpu.memory_space<vmem>>, %arg4: memref<16x128xf32, #tpu.memory_space<vmem>>, %arg5: memref<16x128xf32, #tpu.memory_space<vmem>>) attributes {dimension_semantics = [#tpu.dimension_semantics<parallel>, #tpu.dimension_semantics<arbitrary>], iteration_bounds = array<i64: 1, 1>, scalar_prefetch = 0 : i64, scratch_operands = 1 : i64, tpu.core_type = #tpu.core_type<tc>, window_params = [{transform_indices = @transform_0, window_bounds = array<i64: 16, 1>}, {transform_indices = @transform_1, window_bounds = array<i64: 32, 128>}, {transform_indices = @transform_2, window_bounds = array<i64: 16, 128>}]} {
    %c0_i32 = arith.constant 0 : i32
    %0 = arith.cmpi eq, %arg1, %c0_i32 : i32
    %1 = arith.extui %0 : i1 to i32
    %c0_i32_0 = arith.constant 0 : i32
    %2 = arith.cmpi ne, %1, %c0_i32_0 : i32
    scf.if %2 {
      %cst_10 = arith.constant 0.000000e+00 : f32
      %21 = vector.broadcast %cst_10 : f32 to vector<16x128xf32>
      %c0_11 = arith.constant 0 : index
      %c0_12 = arith.constant 0 : index
      %22 = vector.load %arg5[%c0_11, %c0_12] : memref<16x128xf32, #tpu.memory_space<vmem>>, vector<16x128xf32>
      tpu.vector_store %arg5[%c0_11, %c0_12], %21 {strides = array<i32>} : memref<16x128xf32, #tpu.memory_space<vmem>>, vector<16x128xf32>,
    } else {
    }
    %c0 = arith.constant 0 : index
    %c0_1 = arith.constant 0 : index
    %3 = vector.load %arg2[%c0, %c0_1] : memref<16x1xi32, #tpu.memory_space<vmem>>, vector<16x1xi32>
    %4 = tpu.iota {dimensions = array<i32: 1>} : vector<1x32xi32>
    %c32_i32 = arith.constant 32 : i32
    %5 = arith.muli %arg1, %c32_i32 : i32
    %6 = vector.broadcast %5 : i32 to vector<1x32xi32>
    %7 = arith.addi %4, %6 : vector<1x32xi32>
    %8 = vector.broadcast %3 : vector<16x1xi32> to vector<16x32xi32>
    %9 = vector.broadcast %7 : vector<1x32xi32> to vector<16x32xi32>
    %10 = arith.cmpi eq, %8, %9 : vector<16x32xi32>
    %11 = arith.extui %10 : vector<16x32xi1> to vector<16x32xi32>
    %12 = arith.sitofp %11 : vector<16x32xi32> to vector<16x32xf32>
    %c0_2 = arith.constant 0 : index
    %c0_3 = arith.constant 0 : index
    %13 = vector.load %arg5[%c0_2, %c0_3] : memref<16x128xf32, #tpu.memory_space<vmem>>, vector<16x128xf32>
    %c0_4 = arith.constant 0 : index
    %c0_5 = arith.constant 0 : index
    %14 = vector.load %arg3[%c0_4, %c0_5] : memref<32x128xf32, #tpu.memory_space<vmem>>, vector<32x128xf32>
    %cst = arith.constant dense<0.000000e+00> : vector<16x128xf32>
    %15 = tpu.matmul %12, %14, %cst {dimension_numbers = #tpu.dot_dimension_numbers<[1], [0], [0], [1], [0, 0, 1, 1], [], []>, precision = #tpu.contract_precision<fp32>} : vector<16x32xf32>, vector<32x128xf32>, vector<16x128xf32> -> vector<16x128xf32>
    %16 = arith.addf %13, %15 : vector<16x128xf32>
    %c0_6 = arith.constant 0 : index
    %c0_7 = arith.constant 0 : index
    %17 = vector.load %arg5[%c0_6, %c0_7] : memref<16x128xf32, #tpu.memory_space<vmem>>, vector<16x128xf32>
    tpu.vector_store %arg5[%c0_6, %c0_7], %16 {strides = array<i32>} : memref<16x128xf32, #tpu.memory_space<vmem>>, vector<16x128xf32>,
    %c0_i32_8 = arith.constant 0 : i32
    %18 = arith.cmpi eq, %arg1, %c0_i32_8 : i32
    %19 = arith.extui %18 : i1 to i32
    %c0_i32_9 = arith.constant 0 : i32
    %20 = arith.cmpi ne, %19, %c0_i32_9 : i32
    scf.if %20 {
      %c0_10 = arith.constant 0 : index
      %c0_11 = arith.constant 0 : index
      %21 = vector.load %arg5[%c0_10, %c0_11] : memref<16x128xf32, #tpu.memory_space<vmem>>, vector<16x128xf32>
      %cst_12 = arith.constant 11.3137083 : f32
      %22 = vector.broadcast %cst_12 : f32 to vector<16x128xf32>
      %23 = arith.mulf %21, %22 : vector<16x128xf32>
      %c0_13 = arith.constant 0 : index
      %c0_14 = arith.constant 0 : index
      %24 = vector.load %arg4[%c0_13, %c0_14] : memref<16x128xf32, #tpu.memory_space<vmem>>, vector<16x128xf32>
      tpu.vector_store %arg4[%c0_13, %c0_14], %23 {strides = array<i32>} : memref<16x128xf32, #tpu.memory_space<vmem>>, vector<16x128xf32>,
    } else {
    }
    return
  }
  func.func @transform_0(%arg0: i32, %arg1: i32) -> (i32, i32) {
    %c0_i32 = arith.constant 0 : i32
    %c0_i32_0 = arith.constant 0 : i32
    return %arg0, %c0_i32 : i32, i32
  }
  func.func @transform_1(%arg0: i32, %arg1: i32) -> (i32, i32) {
    %c0_i32 = arith.constant 0 : i32
    %c0_i32_0 = arith.constant 0 : i32
    return %arg1, %c0_i32 : i32, i32
  }
  func.func @transform_2(%arg0: i32, %arg1: i32) -> (i32, i32) {
    %c0_i32 = arith.constant 0 : i32
    %c0_i32_0 = arith.constant 0 : i32
    return %arg0, %c0_i32 : i32, i32
  }
}

</mosaic_0001>

<llo_original>
// kernel: tpu_custom_call.1
$region0: #{tpu_custom_call.1}
  #allocation0 [shape = 'u32[]', space=smem, size = 0x4, offset = 0x4, fixed_abs, tag = 'smem constant byte address 0x4 - core index']
  #allocation1 [shape = 'u32[144,128]{1,0:T(1,128)}', space=vmem, size = 0x12000, scoped, tag = 'internal scratch']
  #allocation2 [shape = 'f32[16,128]{1,0:T(8,128)}', space=vmem, size = 0x2000, scoped, tag = 'scratch operand']
  %s0 = inlined_call_operand.vmem [shape: s32[16,1], index: 0, kind: input, shape index: {}]
  %s1 = inlined_call_operand.hbm [shape: f32[32,128], index: 1, kind: input, shape index: {}]
  %s2 = inlined_call_operand.hbm [shape: f32[16,128], index: 2, kind: output, shape index: {}]
  %s3 = sld [smem:[#allocation0]]
  $region30: #{tpu_custom_call.1} parent=0
    _
  %s5 = ssub.s32 1, %s3
  %s6 = scalar_select 0, %s5, %s3
  $region1: #{tpu_custom_call.1} parent=0
    #allocation3 [shape = 'u8[16384]{0}', space=vmem, size = 0x4000, scoped, tag = 'input window, operand 1, single buffered']
    #allocation4 [shape = 's32[1]{0}', space=sflag, size = 0x4, scoped, tag = 'scoped memory for tpu_custom_call.1']
    #allocation5 [shape = 's32[1]{0}', space=sflag, size = 0x4, scoped, tag = 'scoped memory for tpu_custom_call.1']
    #allocation6 [shape = 'u8[8192]{0}', space=vmem, size = 0x2000, scoped, tag = 'output window, operand 0, single buffered']
    %7 = vsyncpa [#allocation4], 0
    %8 = vsyncpa [#allocation5], 0
    // Predicated region
    $region2: #{tpu_custom_call.1} parent=1 // pred_check
      _
    $region3: #{tpu_custom_call.1} parent=1 // pred_check_branch
      %10 = sbr.rel (0) target = $region5
    $region4: #{tpu_custom_call.1} parent=1 // pred_region
      _
    $region5: #{tpu_custom_call.1} parent=1 // pred_fallthru
      _
    // Predicated region
    $region6: #{tpu_custom_call.1} parent=1 // pred_check
      _
    $region7: #{tpu_custom_call.1} parent=1 // pred_check_branch
      %12 = sbr.rel (0) target = $region9
    $region8: #{tpu_custom_call.1} parent=1 // pred_region
      %s14 = ssub.s32 512, 512
      %15 = vsyncadd [#allocation4], %s14
      %s16 = sshll.u32 [#allocation3], 4
      %s17 = int_to_ptr.vmem [resolvable:$true] %s16
      %22 = dma.hbm_to_vmem [thread:$0]  %s1, 512, %s17, [#allocation4], 128, 128, 8
    $region9: #{tpu_custom_call.1} parent=1 // pred_fallthru
      _
    // Predicated region
    $region10: #{tpu_custom_call.1} parent=1 // pred_check
      _
    $region11: #{tpu_custom_call.1} parent=1 // pred_check_branch
      %24 = sbr.rel (0) target = $region13
    $region12: #{tpu_custom_call.1} parent=1 // pred_region
      %25 = dma.done [#allocation4], 512
    $region13: #{tpu_custom_call.1} parent=1 // pred_fallthru
      _
    %p26 = scmp.eq.s32.totalorder 0, 0
    // Predicated region
    $region14: #{tpu_custom_call.1} parent=1 // pred_check
      %p27 = pneg %p26
    $region15: #{tpu_custom_call.1} parent=1 // pred_check_branch
      %29 = sbr.rel (%p27) target = $region17
    $region16: #{tpu_custom_call.1} parent=1 // pred_region
      %30 = vst [vmem:[#allocation2] sm:$0xff] 0.0
      %31 = vst [vmem:[#allocation2 + $0x8] sm:$0xff] 0.0
    $region17: #{tpu_custom_call.1} parent=1 // pred_fallthru
      _
    %v32 = vld [vmem:[%s0] sm:$0xff]
    %v33 = vld [vmem:[%s0 + $0x8] sm:$0xff]
    %v34 = vlaneseq
    %v35 = vand.u32 %v34, 127
    %s36 = smul.u32 0, 32
    %v37 = vstv %s36
    %v38 = vadd.s32 %v35, %v37
    %39 = vset.pattern.permute.xlu0 0
    %40 = vperm.xlu0 %39, %v32
    %v41 = vpop.permute.xlu0 %40
    %42 = vset.pattern.permute.xlu0 0
    %43 = vperm.xlu0 %42, %v33
    %v44 = vpop.permute.xlu0 %43
    %vm45 = vcmp.eq.s32.totalorder %v41, %v38
    %vm46 = vcmp.eq.s32.totalorder %v44, %v38
    %v47 = vsel %vm45, 1, 0
    %v48 = vsel %vm46, 1, 0
    %v49 = vcvt.s32.f32 %v47
    %v50 = vcvt.s32.f32 %v48
    %v51 = vld [vmem:[#allocation2] sm:$0xff]
    %v52 = vld [vmem:[#allocation2 + $0x8] sm:$0xff]
    %v53 = vld [vmem:[#allocation3] sm:$0xff]
    %v54 = vld [vmem:[#allocation3 + $0x8] sm:$0xff]
    %v55 = vld [vmem:[#allocation3 + $0x10] sm:$0xff]
    %v56 = vld [vmem:[#allocation3 + $0x18] sm:$0xff]
    %vm57 = vcmask 261120
    %v59 = vsel %vm57, %v49, 0
    %v62 = vsel %vm57, %v50, 0
    %64 = vmatprep.subr.mxu0 0.0
    %v65 = vand.u32 %v53, 4294901760
    %66 = vmatpush1.msra.mxu0 %v65
    %67 = vmatprep.subr.mxu0 0.0
    %v68 = vand.u32 %v54, 4294901760
    %69 = vmatpush1.msra.mxu0 %v68
    %70 = vmatprep.subr.mxu0 0.0
    %v71 = vand.u32 %v55, 4294901760
    %72 = vmatpush1.msra.mxu0 %v71
    %73 = vmatprep.subr.mxu0 0.0
    %v74 = vand.u32 %v56, 4294901760
    %75 = vmatpush1.msra.mxu0 %v74
    %76 = vmatprep.subr.mxu0 0.0
    %77 = vmatpush1.msra.mxu0 0.0
    %78 = vmatprep.subr.mxu0 0.0
    %79 = vmatpush1.msra.mxu0 0.0
    %80 = vmatprep.subr.mxu0 0.0
    %81 = vmatpush1.msra.mxu0 0.0
    %82 = vmatprep.subr.mxu0 0.0
    %83 = vmatpush1.msra.mxu0 0.0
    %84 = vmatprep.subr.mxu0 0.0
    %85 = vmatpush1.msra.mxu0 0.0
    %86 = vmatprep.subr.mxu0 0.0
    %87 = vmatpush1.msra.mxu0 0.0
    %88 = vmatprep.subr.mxu0 0.0
    %89 = vmatpush1.msra.mxu0 0.0
    %90 = vmatprep.subr.mxu0 0.0
    %91 = vmatpush1.msra.mxu0 0.0
    %92 = vmatprep.subr.mxu0 0.0
    %93 = vmatpush1.msra.mxu0 0.0
    %94 = vmatprep.subr.mxu0 0.0
    %95 = vmatpush1.msra.mxu0 0.0
    %96 = vmatprep.subr.mxu0 0.0
    %97 = vmatpush1.msra.mxu0 0.0
    %98 = vmatprep.subr.mxu0 0.0
    %99 = vmatpush1.msra.mxu0 0.0
    %100 = vmatprep.subr.mxu0 0.0
    %101 = vmatpush1.msra.mxu0 0.0
    %102 = vmatprep.subr.mxu0 0.0
    %103 = vmatpush1.msra.mxu0 0.0
    %104 = vmatprep.subr.mxu0 0.0
    %105 = vmatpush1.msra.mxu0 0.0
    %106 = vmatprep.subr.mxu0 0.0
    %107 = vmatpush1.msra.mxu0 0.0
    %108 = vmatprep.subr.mxu0 0.0
    %109 = vmatpush1.msra.mxu0 0.0
    %110 = vmatprep.subr.mxu0 0.0
    %111 = vmatpush1.msra.mxu0 0.0
    %112 = vmatprep.subr.mxu0 0.0
    %113 = vmatpush1.msra.mxu0 0.0
    %114 = vmatprep.subr.mxu0 0.0
    %115 = vmatpush1.msra.mxu0 0.0
    %116 = vmatprep.subr.mxu0 0.0
    %117 = vmatpush1.msra.mxu0 0.0
    %118 = vmatprep.subr.mxu0 0.0
    %119 = vmatpush1.msra.mxu0 0.0
    %120 = vmatprep.subr.mxu0 0.0
    %121 = vmatpush1.msra.mxu0 0.0
    %122 = vmatprep.subr.mxu0 0.0
    %123 = vmatpush1.msra.mxu0 0.0
    %124 = vmatprep.subr.mxu0 0.0
    %125 = vmatpush1.msra.mxu0 0.0
    %126 = vmatprep.subr.mxu0 0.0
    %127 = vmatpush1.msra.mxu0 0.0
    %128 = vmatprep.subr.mxu0 0.0
    %129 = vmatpush1.msra.mxu0 0.0
    %130 = vmatprep.subr.mxu0 0.0
    %131 = vmatpush1.msra.mxu0 0.0
    %132 = vmatprep.mubr.f32.mxu0 0.0
    %v133 = vand.u32 %v59, 4294901760
    %v134 = vsub.f32 %v59, %v133
    %v135 = vand.u32 %v134, 4294901760
    %v136 = vsub.f32 %v134, %v135
    %v137 = vand.u32 %v136, 4294901760
    %138 = vmatmul.mubr.f32.gmra.mrb[0].mxu0 %v137
    %v139 = vpop.f32.mrb[0].mxu0
    %v140 = vadd.f32 0.0, %v139
    %v141 = vpop.f32.mrb[0].mxu0
    %142 = vmatprep.mubr.f32.mxu0 0.0
    %v143 = vand.u32 %v62, 4294901760
    %v144 = vsub.f32 %v62, %v143
    %v145 = vand.u32 %v144, 4294901760
    %v146 = vsub.f32 %v144, %v145
    %v147 = vand.u32 %v146, 4294901760
    %148 = vmatmul.mubr.f32.gmra.mrb[0].mxu0 %v147
    %v149 = vpop.f32.mrb[0].mxu0
    %v150 = vadd.f32 0.0, %v149
    %v151 = vpop.f32.mrb[0].mxu0
    %152 = vdwg.mxu0
    %153 = vmatprep.subr.mxu0 0.0
    %v154 = vand.u32 %v53, 4294901760
    %v155 = vsub.f32 %v53, %v154
    %v156 = vand.u32 %v155, 4294901760
    %v157 = vsub.f32 %v155, %v156
    %v158 = vand.u32 %v157, 4294901760
    %159 = vmatpush1.msra.mxu0 %v158
    %160 = vmatprep.subr.mxu0 0.0
    %v161 = vand.u32 %v54, 4294901760
    %v162 = vsub.f32 %v54, %v161
    %v163 = vand.u32 %v162, 4294901760
    %v164 = vsub.f32 %v162, %v163
    %v165 = vand.u32 %v164, 4294901760
    %166 = vmatpush1.msra.mxu0 %v165
    %167 = vmatprep.subr.mxu0 0.0
    %v168 = vand.u32 %v55, 4294901760
    %v169 = vsub.f32 %v55, %v168
    %v170 = vand.u32 %v169, 4294901760
    %v171 = vsub.f32 %v169, %v170
    %v172 = vand.u32 %v171, 4294901760
    %173 = vmatpush1.msra.mxu0 %v172
    %174 = vmatprep.subr.mxu0 0.0
    %v175 = vand.u32 %v56, 4294901760
    %v176 = vsub.f32 %v56, %v175
    %v177 = vand.u32 %v176, 4294901760
    %v178 = vsub.f32 %v176, %v177
    %v179 = vand.u32 %v178, 4294901760
    %180 = vmatpush1.msra.mxu0 %v179
    %181 = vmatprep.subr.mxu0 0.0
    %182 = vmatpush1.msra.mxu0 0.0
    %183 = vmatprep.subr.mxu0 0.0
    %184 = vmatpush1.msra.mxu0 0.0
    %185 = vmatprep.subr.mxu0 0.0
    %186 = vmatpush1.msra.mxu0 0.0
    %187 = vmatprep.subr.mxu0 0.0
    %188 = vmatpush1.msra.mxu0 0.0
    %189 = vmatprep.subr.mxu0 0.0
    %190 = vmatpush1.msra.mxu0 0.0
    %191 = vmatprep.subr.mxu0 0.0
    %192 = vmatpush1.msra.mxu0 0.0
    %193 = vmatprep.subr.mxu0 0.0
    %194 = vmatpush1.msra.mxu0 0.0
    %195 = vmatprep.subr.mxu0 0.0
    %196 = vmatpush1.msra.mxu0 0.0
    %197 = vmatprep.subr.mxu0 0.0
    %198 = vmatpush1.msra.mxu0 0.0
    %199 = vmatprep.subr.mxu0 0.0
    %200 = vmatpush1.msra.mxu0 0.0
    %201 = vmatprep.subr.mxu0 0.0
    %202 = vmatpush1.msra.mxu0 0.0
    %203 = vmatprep.subr.mxu0 0.0
    %204 = vmatpush1.msra.mxu0 0.0
    %205 = vmatprep.subr.mxu0 0.0
    %206 = vmatpush1.msra.mxu0 0.0
    %207 = vmatprep.subr.mxu0 0.0
    %208 = vmatpush1.msra.mxu0 0.0
    %209 = vmatprep.subr.mxu0 0.0
    %210 = vmatpush1.msra.mxu0 0.0
    %211 = vmatprep.subr.mxu0 0.0
    %212 = vmatpush1.msra.mxu0 0.0
    %213 = vmatprep.subr.mxu0 0.0
    %214 = vmatpush1.msra.mxu0 0.0
    %215 = vmatprep.subr.mxu0 0.0
    %216 = vmatpush1.msra.mxu0 0.0
    %217 = vmatprep.subr.mxu0 0.0
    %218 = vmatpush1.msra.mxu0 0.0
    %219 = vmatprep.subr.mxu0 0.0
    %220 = vmatpush1.msra.mxu0 0.0
    %221 = vmatprep.subr.mxu0 0.0
    %222 = vmatpush1.msra.mxu0 0.0
    %223 = vmatprep.subr.mxu0 0.0
    %224 = vmatpush1.msra.mxu0 0.0
    %225 = vmatprep.subr.mxu0 0.0
    %226 = vmatpush1.msra.mxu0 0.0
    %227 = vmatprep.subr.mxu0 0.0
    %228 = vmatpush1.msra.mxu0 0.0
    %229 = vmatprep.subr.mxu0 0.0
    %230 = vmatpush1.msra.mxu0 0.0
    %231 = vmatprep.subr.mxu0 0.0
    %232 = vmatpush1.msra.mxu0 0.0
    %233 = vmatprep.subr.mxu0 0.0
    %234 = vmatpush1.msra.mxu0 0.0
    %235 = vmatprep.subr.mxu0 0.0
    %236 = vmatpush1.msra.mxu0 0.0
    %237 = vmatprep.mubr.f32.mxu0 0.0
    %v238 = vand.u32 %v59, 4294901760
    %239 = vmatmul.mubr.f32.gmra.mrb[0].mxu0 %v238
    %v240 = vpop.f32.mrb[0].mxu0
    %v241 = vadd.f32 %v140, %v240
    %v242 = vpop.f32.mrb[0].mxu0
    %243 = vmatprep.mubr.f32.mxu0 0.0
    %v244 = vand.u32 %v62, 4294901760
    %245 = vmatmul.mubr.f32.gmra.mrb[0].mxu0 %v244
    %v246 = vpop.f32.mrb[0].mxu0
    %v247 = vadd.f32 %v150, %v246
    %v248 = vpop.f32.mrb[0].mxu0
    %249 = vdwg.mxu0
    %250 = vmatprep.subr.mxu0 0.0
    %v251 = vand.u32 %v53, 4294901760
    %v252 = vsub.f32 %v53, %v251
    %253 = vmatpush1.msra.mxu0 %v252
    %254 = vmatprep.subr.mxu0 0.0
    %v255 = vand.u32 %v54, 4294901760
    %v256 = vsub.f32 %v54, %v255
    %257 = vmatpush1.msra.mxu0 %v256
    %258 = vmatprep.subr.mxu0 0.0
    %v259 = vand.u32 %v55, 4294901760
    %v260 = vsub.f32 %v55, %v259
    %261 = vmatpush1.msra.mxu0 %v260
    %262 = vmatprep.subr.mxu0 0.0
    %v263 = vand.u32 %v56, 4294901760
    %v264 = vsub.f32 %v56, %v263
    %265 = vmatpush1.msra.mxu0 %v264
    %266 = vmatprep.subr.mxu0 0.0
    %267 = vmatpush1.msra.mxu0 0.0
    %268 = vmatprep.subr.mxu0 0.0
    %269 = vmatpush1.msra.mxu0 0.0
    %270 = vmatprep.subr.mxu0 0.0
    %271 = vmatpush1.msra.mxu0 0.0
    %272 = vmatprep.subr.mxu0 0.0
    %273 = vmatpush1.msra.mxu0 0.0
    %274 = vmatprep.subr.mxu0 0.0
    %275 = vmatpush1.msra.mxu0 0.0
    %276 = vmatprep.subr.mxu0 0.0
    %277 = vmatpush1.msra.mxu0 0.0
    %278 = vmatprep.subr.mxu0 0.0
    %279 = vmatpush1.msra.mxu0 0.0
    %280 = vmatprep.subr.mxu0 0.0
    %281 = vmatpush1.msra.mxu0 0.0
    %282 = vmatprep.subr.mxu0 0.0
    %283 = vmatpush1.msra.mxu0 0.0
    %284 = vmatprep.subr.mxu0 0.0
    %285 = vmatpush1.msra.mxu0 0.0
    %286 = vmatprep.subr.mxu0 0.0
    %287 = vmatpush1.msra.mxu0 0.0
    %288 = vmatprep.subr.mxu0 0.0
    %289 = vmatpush1.msra.mxu0 0.0
    %290 = vmatprep.subr.mxu0 0.0
    %291 = vmatpush1.msra.mxu0 0.0
    %292 = vmatprep.subr.mxu0 0.0
    %293 = vmatpush1.msra.mxu0 0.0
    %294 = vmatprep.subr.mxu0 0.0
    %295 = vmatpush1.msra.mxu0 0.0
    %296 = vmatprep.subr.mxu0 0.0
    %297 = vmatpush1.msra.mxu0 0.0
    %298 = vmatprep.subr.mxu0 0.0
    %299 = vmatpush1.msra.mxu0 0.0
    %300 = vmatprep.subr.mxu0 0.0
    %301 = vmatpush1.msra.mxu0 0.0
    %302 = vmatprep.subr.mxu0 0.0
    %303 = vmatpush1.msra.mxu0 0.0
    %304 = vmatprep.subr.mxu0 0.0
    %305 = vmatpush1.msra.mxu0 0.0
    %306 = vmatprep.subr.mxu0 0.0
    %307 = vmatpush1.msra.mxu0 0.0
    %308 = vmatprep.subr.mxu0 0.0
    %309 = vmatpush1.msra.mxu0 0.0
    %310 = vmatprep.subr.mxu0 0.0
    %311 = vmatpush1.msra.mxu0 0.0
    %312 = vmatprep.subr.mxu0 0.0
    %313 = vmatpush1.msra.mxu0 0.0
    %314 = vmatprep.subr.mxu0 0.0
    %315 = vmatpush1.msra.mxu0 0.0
    %316 = vmatprep.subr.mxu0 0.0
    %317 = vmatpush1.msra.mxu0 0.0
    %318 = vmatprep.subr.mxu0 0.0
    %319 = vmatpush1.msra.mxu0 0.0
    %320 = vmatprep.subr.mxu0 0.0
    %321 = vmatpush1.msra.mxu0 0.0
    %322 = vmatprep.mubr.f32.mxu0 0.0
    %v323 = vand.u32 %v59, 4294901760
    %v324 = vsub.f32 %v59, %v323
    %325 = vmatmul.mubr.f32.gmra.mrb[0].mxu0 %v324
    %v326 = vpop.f32.mrb[0].mxu0
    %v327 = vadd.f32 %v241, %v326
    %v328 = vpop.f32.mrb[0].mxu0
    %329 = vmatprep.mubr.f32.mxu0 0.0
    %v330 = vand.u32 %v62, 4294901760
    %v331 = vsub.f32 %v62, %v330
    %332 = vmatmul.mubr.f32.gmra.mrb[0].mxu0 %v331
    %v333 = vpop.f32.mrb[0].mxu0
    %v334 = vadd.f32 %v247, %v333
    %v335 = vpop.f32.mrb[0].mxu0
    %336 = vdwg.mxu0
    %337 = vmatprep.subr.mxu0 0.0
    %v338 = vand.u32 %v53, 4294901760
    %339 = vmatpush1.msra.mxu0 %v338
    %340 = vmatprep.subr.mxu0 0.0
    %v341 = vand.u32 %v54, 4294901760
    %342 = vmatpush1.msra.mxu0 %v341
    %343 = vmatprep.subr.mxu0 0.0
    %v344 = vand.u32 %v55, 4294901760
    %345 = vmatpush1.msra.mxu0 %v344
    %346 = vmatprep.subr.mxu0 0.0
    %v347 = vand.u32 %v56, 4294901760
    %348 = vmatpush1.msra.mxu0 %v347
    %349 = vmatprep.subr.mxu0 0.0
    %350 = vmatpush1.msra.mxu0 0.0
    %351 = vmatprep.subr.mxu0 0.0
    %352 = vmatpush1.msra.mxu0 0.0
    %353 = vmatprep.subr.mxu0 0.0
    %354 = vmatpush1.msra.mxu0 0.0
    %355 = vmatprep.subr.mxu0 0.0
    %356 = vmatpush1.msra.mxu0 0.0
    %357 = vmatprep.subr.mxu0 0.0
    %358 = vmatpush1.msra.mxu0 0.0
    %359 = vmatprep.subr.mxu0 0.0
    %360 = vmatpush1.msra.mxu0 0.0
    %361 = vmatprep.subr.mxu0 0.0
    %362 = vmatpush1.msra.mxu0 0.0
    %363 = vmatprep.subr.mxu0 0.0
    %364 = vmatpush1.msra.mxu0 0.0
    %365 = vmatprep.subr.mxu0 0.0
    %366 = vmatpush1.msra.mxu0 0.0
    %367 = vmatprep.subr.mxu0 0.0
    %368 = vmatpush1.msra.mxu0 0.0
    %369 = vmatprep.subr.mxu0 0.0
    %370 = vmatpush1.msra.mxu0 0.0
    %371 = vmatprep.subr.mxu0 0.0
    %372 = vmatpush1.msra.mxu0 0.0
    %373 = vmatprep.subr.mxu0 0.0
    %374 = vmatpush1.msra.mxu0 0.0
    %375 = vmatprep.subr.mxu0 0.0
    %376 = vmatpush1.msra.mxu0 0.0
    %377 = vmatprep.subr.mxu0 0.0
    %378 = vmatpush1.msra.mxu0 0.0
    %379 = vmatprep.subr.mxu0 0.0
    %380 = vmatpush1.msra.mxu0 0.0
    %381 = vmatprep.subr.mxu0 0.0
    %382 = vmatpush1.msra.mxu0 0.0
    %383 = vmatprep.subr.mxu0 0.0
    %384 = vmatpush1.msra.mxu0 0.0
    %385 = vmatprep.subr.mxu0 0.0
    %386 = vmatpush1.msra.mxu0 0.0
    %387 = vmatprep.subr.mxu0 0.0
    %388 = vmatpush1.msra.mxu0 0.0
    %389 = vmatprep.subr.mxu0 0.0
    %390 = vmatpush1.msra.mxu0 0.0
    %391 = vmatprep.subr.mxu0 0.0
    %392 = vmatpush1.msra.mxu0 0.0
    %393 = vmatprep.subr.mxu0 0.0
    %394 = vmatpush1.msra.mxu0 0.0
    %395 = vmatprep.subr.mxu0 0.0
    %396 = vmatpush1.msra.mxu0 0.0
    %397 = vmatprep.subr.mxu0 0.0
    %398 = vmatpush1.msra.mxu0 0.0
    %399 = vmatprep.subr.mxu0 0.0
    %400 = vmatpush1.msra.mxu0 0.0
    %401 = vmatprep.subr.mxu0 0.0
    %402 = vmatpush1.msra.mxu0 0.0
    %403 = vmatprep.subr.mxu0 0.0
    %404 = vmatpush1.msra.mxu0 0.0
    %405 = vmatprep.mubr.f32.mxu0 0.0
    %v406 = vand.u32 %v59, 4294901760
    %v407 = vsub.f32 %v59, %v406
    %v408 = vand.u32 %v407, 4294901760
    %409 = vmatmul.mubr.f32.gmra.mrb[0].mxu0 %v408
    %v410 = vpop.f32.mrb[0].mxu0
    %v411 = vadd.f32 %v327, %v410
    %v412 = vpop.f32.mrb[0].mxu0
    %413 = vmatprep.mubr.f32.mxu0 0.0
    %v414 = vand.u32 %v62, 4294901760
    %v415 = vsub.f32 %v62, %v414
    %v416 = vand.u32 %v415, 4294901760
    %417 = vmatmul.mubr.f32.gmra.mrb[0].mxu0 %v416
    %v418 = vpop.f32.mrb[0].mxu0
    %v419 = vadd.f32 %v334, %v418
    %v420 = vpop.f32.mrb[0].mxu0
    %421 = vdwg.mxu0
    %422 = vmatprep.subr.mxu0 0.0
    %v423 = vand.u32 %v53, 4294901760
    %v424 = vsub.f32 %v53, %v423
    %v425 = vand.u32 %v424, 4294901760
    %426 = vmatpush1.msra.mxu0 %v425
    %427 = vmatprep.subr.mxu0 0.0
    %v428 = vand.u32 %v54, 4294901760
    %v429 = vsub.f32 %v54, %v428
    %v430 = vand.u32 %v429, 4294901760
    %431 = vmatpush1.msra.mxu0 %v430
    %432 = vmatprep.subr.mxu0 0.0
    %v433 = vand.u32 %v55, 4294901760
    %v434 = vsub.f32 %v55, %v433
    %v435 = vand.u32 %v434, 4294901760
    %436 = vmatpush1.msra.mxu0 %v435
    %437 = vmatprep.subr.mxu0 0.0
    %v438 = vand.u32 %v56, 4294901760
    %v439 = vsub.f32 %v56, %v438
    %v440 = vand.u32 %v439, 4294901760
    %441 = vmatpush1.msra.mxu0 %v440
    %442 = vmatprep.subr.mxu0 0.0
    %443 = vmatpush1.msra.mxu0 0.0
    %444 = vmatprep.subr.mxu0 0.0
    %445 = vmatpush1.msra.mxu0 0.0
    %446 = vmatprep.subr.mxu0 0.0
    %447 = vmatpush1.msra.mxu0 0.0
    %448 = vmatprep.subr.mxu0 0.0
    %449 = vmatpush1.msra.mxu0 0.0
    %450 = vmatprep.subr.mxu0 0.0
    %451 = vmatpush1.msra.mxu0 0.0
    %452 = vmatprep.subr.mxu0 0.0
    %453 = vmatpush1.msra.mxu0 0.0
    %454 = vmatprep.subr.mxu0 0.0
    %455 = vmatpush1.msra.mxu0 0.0
    %456 = vmatprep.subr.mxu0 0.0
    %457 = vmatpush1.msra.mxu0 0.0
    %458 = vmatprep.subr.mxu0 0.0
    %459 = vmatpush1.msra.mxu0 0.0
    %460 = vmatprep.subr.mxu0 0.0
    %461 = vmatpush1.msra.mxu0 0.0
    %462 = vmatprep.subr.mxu0 0.0
    %463 = vmatpush1.msra.mxu0 0.0
    %464 = vmatprep.subr.mxu0 0.0
    %465 = vmatpush1.msra.mxu0 0.0
    %466 = vmatprep.subr.mxu0 0.0
    %467 = vmatpush1.msra.mxu0 0.0
    %468 = vmatprep.subr.mxu0 0.0
    %469 = vmatpush1.msra.mxu0 0.0
    %470 = vmatprep.subr.mxu0 0.0
    %471 = vmatpush1.msra.mxu0 0.0
    %472 = vmatprep.subr.mxu0 0.0
    %473 = vmatpush1.msra.mxu0 0.0
    %474 = vmatprep.subr.mxu0 0.0
    %475 = vmatpush1.msra.mxu0 0.0
    %476 = vmatprep.subr.mxu0 0.0
    %477 = vmatpush1.msra.mxu0 0.0
    %478 = vmatprep.subr.mxu0 0.0
    %479 = vmatpush1.msra.mxu0 0.0
    %480 = vmatprep.subr.mxu0 0.0
    %481 = vmatpush1.msra.mxu0 0.0
    %482 = vmatprep.subr.mxu0 0.0
    %483 = vmatpush1.msra.mxu0 0.0
    %484 = vmatprep.subr.mxu0 0.0
    %485 = vmatpush1.msra.mxu0 0.0
    %486 = vmatprep.subr.mxu0 0.0
    %487 = vmatpush1.msra.mxu0 0.0
    %488 = vmatprep.subr.mxu0 0.0
    %489 = vmatpush1.msra.mxu0 0.0
    %490 = vmatprep.subr.mxu0 0.0
    %491 = vmatpush1.msra.mxu0 0.0
    %492 = vmatprep.subr.mxu0 0.0
    %493 = vmatpush1.msra.mxu0 0.0
    %494 = vmatprep.subr.mxu0 0.0
    %495 = vmatpush1.msra.mxu0 0.0
    %496 = vmatprep.subr.mxu0 0.0
    %497 = vmatpush1.msra.mxu0 0.0
    %498 = vmatprep.mubr.f32.mxu0 0.0
    %v499 = vand.u32 %v59, 4294901760
    %500 = vmatmul.mubr.f32.gmra.mrb[0].mxu0 %v499
    %v501 = vpop.f32.mrb[0].mxu0
    %v502 = vadd.f32 %v411, %v501
    %v503 = vpop.f32.mrb[0].mxu0
    %504 = vmatprep.mubr.f32.mxu0 0.0
    %v505 = vand.u32 %v62, 4294901760
    %506 = vmatmul.mubr.f32.gmra.mrb[0].mxu0 %v505
    %v507 = vpop.f32.mrb[0].mxu0
    %v508 = vadd.f32 %v419, %v507
    %v509 = vpop.f32.mrb[0].mxu0
    %510 = vdwg.mxu0
    %511 = vmatprep.subr.mxu0 0.0
    %v512 = vand.u32 %v53, 4294901760
    %513 = vmatpush1.msra.mxu0 %v512
    %514 = vmatprep.subr.mxu0 0.0
    %v515 = vand.u32 %v54, 4294901760
    %516 = vmatpush1.msra.mxu0 %v515
    %517 = vmatprep.subr.mxu0 0.0
    %v518 = vand.u32 %v55, 4294901760
    %519 = vmatpush1.msra.mxu0 %v518
    %520 = vmatprep.subr.mxu0 0.0
    %v521 = vand.u32 %v56, 4294901760
    %522 = vmatpush1.msra.mxu0 %v521
    %523 = vmatprep.subr.mxu0 0.0
    %524 = vmatpush1.msra.mxu0 0.0
    %525 = vmatprep.subr.mxu0 0.0
    %526 = vmatpush1.msra.mxu0 0.0
    %527 = vmatprep.subr.mxu0 0.0
    %528 = vmatpush1.msra.mxu0 0.0
    %529 = vmatprep.subr.mxu0 0.0
    %530 = vmatpush1.msra.mxu0 0.0
    %531 = vmatprep.subr.mxu0 0.0
    %532 = vmatpush1.msra.mxu0 0.0
    %533 = vmatprep.subr.mxu0 0.0
    %534 = vmatpush1.msra.mxu0 0.0
    %535 = vmatprep.subr.mxu0 0.0
    %536 = vmatpush1.msra.mxu0 0.0
    %537 = vmatprep.subr.mxu0 0.0
    %538 = vmatpush1.msra.mxu0 0.0
    %539 = vmatprep.subr.mxu0 0.0
    %540 = vmatpush1.msra.mxu0 0.0
    %541 = vmatprep.subr.mxu0 0.0
    %542 = vmatpush1.msra.mxu0 0.0
    %543 = vmatprep.subr.mxu0 0.0
    %544 = vmatpush1.msra.mxu0 0.0
    %545 = vmatprep.subr.mxu0 0.0
    %546 = vmatpush1.msra.mxu0 0.0
    %547 = vmatprep.subr.mxu0 0.0
    %548 = vmatpush1.msra.mxu0 0.0
    %549 = vmatprep.subr.mxu0 0.0
    %550 = vmatpush1.msra.mxu0 0.0
    %551 = vmatprep.subr.mxu0 0.0
    %552 = vmatpush1.msra.mxu0 0.0
    %553 = vmatprep.subr.mxu0 0.0
    %554 = vmatpush1.msra.mxu0 0.0
    %555 = vmatprep.subr.mxu0 0.0
    %556 = vmatpush1.msra.mxu0 0.0
    %557 = vmatprep.subr.mxu0 0.0
    %558 = vmatpush1.msra.mxu0 0.0
    %559 = vmatprep.subr.mxu0 0.0
    %560 = vmatpush1.msra.mxu0 0.0
    %561 = vmatprep.subr.mxu0 0.0
    %562 = vmatpush1.msra.mxu0 0.0
    %563 = vmatprep.subr.mxu0 0.0
    %564 = vmatpush1.msra.mxu0 0.0
    %565 = vmatprep.subr.mxu0 0.0
    %566 = vmatpush1.msra.mxu0 0.0
    %567 = vmatprep.subr.mxu0 0.0
    %568 = vmatpush1.msra.mxu0 0.0
    %569 = vmatprep.subr.mxu0 0.0
    %570 = vmatpush1.msra.mxu0 0.0
    %571 = vmatprep.subr.mxu0 0.0
    %572 = vmatpush1.msra.mxu0 0.0
    %573 = vmatprep.subr.mxu0 0.0
    %574 = vmatpush1.msra.mxu0 0.0
    %575 = vmatprep.subr.mxu0 0.0
    %576 = vmatpush1.msra.mxu0 0.0
    %577 = vmatprep.subr.mxu0 0.0
    %578 = vmatpush1.msra.mxu0 0.0
    %579 = vmatprep.mubr.f32.mxu0 0.0
    %v580 = vand.u32 %v59, 4294901760
    %581 = vmatmul.mubr.f32.gmra.mrb[0].mxu0 %v580
    %v582 = vpop.f32.mrb[0].mxu0
    %v583 = vadd.f32 %v502, %v582
    %v584 = vpop.f32.mrb[0].mxu0
    %585 = vmatprep.mubr.f32.mxu0 0.0
    %v586 = vand.u32 %v62, 4294901760
    %587 = vmatmul.mubr.f32.gmra.mrb[0].mxu0 %v586
    %v588 = vpop.f32.mrb[0].mxu0
    %v589 = vadd.f32 %v508, %v588
    %v590 = vpop.f32.mrb[0].mxu0
    %591 = vdwg.mxu0
    %v592 = vadd.f32 %v51, %v583
    %v593 = vadd.f32 %v52, %v589
    %594 = vst [vmem:[#allocation2] sm:$0xff] %v592
    %595 = vst [vmem:[#allocation2 + $0x8] sm:$0xff] %v593
    // Predicated region
    $region18: #{tpu_custom_call.1} parent=1 // pred_check
      %p596 = pneg %p26
    $region19: #{tpu_custom_call.1} parent=1 // pred_check_branch
      %598 = sbr.rel (%p596) target = $region21
    $region20: #{tpu_custom_call.1} parent=1 // pred_region
      %v599 = vld [vmem:[#allocation2] sm:$0xff]
      %v600 = vld [vmem:[#allocation2 + $0x8] sm:$0xff]
      %v601 = vmul.f32 %v599, 11.313708
      %v602 = vmul.f32 %v600, 11.313708
      %603 = vst [vmem:[#allocation6] sm:$0xff] %v601
      %604 = vst [vmem:[#allocation6 + $0x8] sm:$0xff] %v602
    $region21: #{tpu_custom_call.1} parent=1 // pred_fallthru
      _
    // Predicated region
    $region22: #{tpu_custom_call.1} parent=1 // pred_check
      _
    $region23: #{tpu_custom_call.1} parent=1 // pred_check_branch
      %606 = sbr.rel (0) target = $region25
    $region24: #{tpu_custom_call.1} parent=1 // pred_region
      %s608 = ssub.s32 256, 256
      %609 = vsyncadd [#allocation5], %s608
      %s610 = sshll.u32 [#allocation6], 4
      %s611 = int_to_ptr.vmem [resolvable:$true] %s610
      %616 = dma.vmem_to_hbm [thread:$0]  %s611, 256, %s2, [#allocation5], 128, 128, 8
    $region25: #{tpu_custom_call.1} parent=1 // pred_fallthru
      _
    // Predicated region
    $region26: #{tpu_custom_call.1} parent=1 // pred_check
      _
    $region27: #{tpu_custom_call.1} parent=1 // pred_check_branch
      %618 = sbr.rel (0) target = $region29
    $region28: #{tpu_custom_call.1} parent=1 // pred_region
      %619 = dma.done [#allocation5], 256
    $region29: #{tpu_custom_call.1} parent=1 // pred_fallthru
      _
    %620 = vsyncpa [#allocation4], 1
    %621 = vsyncpa [#allocation5], 1

</llo_original>
